<compile_context>
chip_gen: v7x
topology: tpu7x:2x2x1
jax: 0.10.0
libtpu: 0.0.40
codegen_flags: <defaults>
</compile_context>

<pallas_src>
import jax
import jax.numpy as jnp
from jax.experimental import pallas as pl
from jax.experimental.pallas import tpu as pltpu


def embed_kernel(ids_ref, tok_row_ref, pos_row_ref, out_ref):
    # ids_ref: (B*T,) int32 in SMEM (scalar prefetch; it drives the index_maps,
    #          the kernel body does not need it).
    # tok_row_ref / pos_row_ref / out_ref: (1, 1, D) VMEM blocks for the current row.
    del ids_ref
    # TODO(synk): nn.Dropout training-mode masking omitted; eval-mode (identity) semantics.
    out_ref[...] = tok_row_ref[...] + pos_row_ref[...]


def embedding_stem(idx, tok_emb_w, pos_emb, *, block_size):
    """idx: (B, T) int32; tok_emb_w: (V, D); pos_emb: (block_size, D) -> (B, T, D)."""
    B, T = idx.shape
    assert T <= block_size, "Cannot forward, model block size is exhausted."
    V, D = tok_emb_w.shape
    BT = B * T

    # Token ids -> flat int32 vector for scalar prefetch (lives in SMEM, read by the
    # scalar unit inside the index_maps).  Clamp for safety: nn.Embedding would raise
    # on out-of-range ids; an unclamped id here would drive an out-of-range DMA.
    ids = jnp.clip(idx.reshape(BT).astype(jnp.int32), 0, V - 1)

    # View tensors as (rows, 1, D) so every block's last two dims equal the array's
    # last two dims (size-1 sublane leading dim is carried in the first, blocked axis).
    tab3 = tok_emb_w.reshape(V, 1, D)
    pos3 = pos_emb[:T, :].reshape(T, 1, D)

    out = pl.pallas_call(
        embed_kernel,
        out_shape=jax.ShapeDtypeStruct((BT, 1, D), tok_emb_w.dtype),
        grid_spec=pltpu.PrefetchScalarGridSpec(
            num_scalar_prefetch=1,            # ids -> SMEM, passed to every index_map
            grid=(BT,),                       # one flattened (b, t) row per step
            in_specs=[
                # Gather: the embedding-table block index is the token id itself.
                pl.BlockSpec((1, 1, D), lambda r, ids_ref: (ids_ref[r], 0, 0)),
                # Positional row for flattened row r is r % T.
                pl.BlockSpec((1, 1, D), lambda r, ids_ref: (r % T, 0, 0)),
            ],
            out_specs=pl.BlockSpec((1, 1, D), lambda r, ids_ref: (r, 0, 0)),
        ),
        compiler_params=pltpu.CompilerParams(
            dimension_semantics=("parallel",)),   # rows are independent -> megacore
    )(ids, tab3, pos3)

    return out.reshape(B, T, D)


if __name__ == "__main__":
    # Small config consistent with the module: vocab_size=64, n_embd=128, block_size=16
    B, T = 2, 8
    V, D, BLOCK_SIZE = 64, 128, 16

    key = jax.random.PRNGKey(0)
    k_idx, k_w, k_pos = jax.random.split(key, 3)

    idx = jax.random.randint(k_idx, (B, T), 0, V, dtype=jnp.int32)
    # nn.Embedding default init ~ N(0, 1).  pos_emb is initialized to zeros in the
    # module; use small random values here so the positional add is actually exercised.
    tok_emb_w = jax.random.normal(k_w, (V, D), dtype=jnp.float32)
    pos_emb = 0.02 * jax.random.normal(k_pos, (BLOCK_SIZE, D), dtype=jnp.float32)

    out = embedding_stem(idx, tok_emb_w, pos_emb, block_size=BLOCK_SIZE)
    out = jax.block_until_ready(out)

    # Reference check (plain JAX)
    ref = jnp.take(tok_emb_w, idx, axis=0) + pos_emb[None, :T, :]
    assert out.shape == (B, T, D)
    assert jnp.allclose(out, ref, atol=1e-5, rtol=1e-5)

    print("KERNEL_OK")
</pallas_src>

<mosaic_0001>
module attributes {stable_mosaic.version = 11 : i64} {
  func.func @embed_kernel(%arg0: i32, %arg1: memref<16xi32, #tpu.memory_space<smem>>, %arg2: memref<1x1x128xf32, #tpu.memory_space<vmem>>, %arg3: memref<1x1x128xf32, #tpu.memory_space<vmem>>, %arg4: memref<1x1x128xf32, #tpu.memory_space<vmem>>) attributes {dimension_semantics = [#tpu.dimension_semantics<parallel>], iteration_bounds = array<i64: 16>, scalar_prefetch = 1 : i64, scratch_operands = 0 : i64, tpu.core_type = #tpu.core_type<tc>, window_params = [{transform_indices = @transform_0, window_bounds = array<i64: 1, 1, 128>}, {transform_indices = @transform_1, window_bounds = array<i64: 1, 1, 128>}, {transform_indices = @transform_2, window_bounds = array<i64: 1, 1, 128>}]} {
    %c0 = arith.constant 0 : index
    %c0_0 = arith.constant 0 : index
    %c0_1 = arith.constant 0 : index
    %0 = vector.load %arg2[%c0, %c0_0, %c0_1] : memref<1x1x128xf32, #tpu.memory_space<vmem>>, vector<1x1x128xf32>
    %c0_2 = arith.constant 0 : index
    %c0_3 = arith.constant 0 : index
    %c0_4 = arith.constant 0 : index
    %1 = vector.load %arg3[%c0_2, %c0_3, %c0_4] : memref<1x1x128xf32, #tpu.memory_space<vmem>>, vector<1x1x128xf32>
    %2 = arith.addf %0, %1 : vector<1x1x128xf32>
    %c0_5 = arith.constant 0 : index
    %c0_6 = arith.constant 0 : index
    %c0_7 = arith.constant 0 : index
    %3 = vector.load %arg4[%c0_5, %c0_6, %c0_7] : memref<1x1x128xf32, #tpu.memory_space<vmem>>, vector<1x1x128xf32>
    tpu.vector_store %arg4[%c0_5, %c0_6, %c0_7], %2 {strides = array<i32>} : memref<1x1x128xf32, #tpu.memory_space<vmem>>, vector<1x1x128xf32>,
    return
  }
  func.func @transform_0(%arg0: i32, %arg1: memref<16xi32, #tpu.memory_space<smem>>) -> (i32, i32, i32) {
    %0 = arith.index_cast %arg0 : i32 to index
    %1 = memref.load %arg1[%0] : memref<16xi32, #tpu.memory_space<smem>>
    %c0_i32 = arith.constant 0 : i32
    %c0_i32_0 = arith.constant 0 : i32
    %c0_i32_1 = arith.constant 0 : i32
    return %1, %c0_i32, %c0_i32_0 : i32, i32, i32
  }
  func.func @transform_1(%arg0: i32, %arg1: memref<16xi32, #tpu.memory_space<smem>>) -> (i32, i32, i32) {
    %c8_i32 = arith.constant 8 : i32
    %c0_i32 = arith.constant 0 : i32
    %0 = arith.cmpi eq, %c8_i32, %c0_i32 : i32
    %c1_i32 = arith.constant 1 : i32
    %1 = arith.select %0, %c1_i32, %c8_i32 : i32
    %2 = arith.remsi %arg0, %1 : i32
    %c0_i32_0 = arith.constant 0 : i32
    %3 = arith.cmpi ne, %2, %c0_i32_0 : i32
    %c0_i32_1 = arith.constant 0 : i32
    %4 = arith.cmpi slt, %2, %c0_i32_1 : i32
    %c0_i32_2 = arith.constant 0 : i32
    %5 = arith.cmpi slt, %1, %c0_i32_2 : i32
    %6 = arith.xori %4, %5 : i1
    %7 = arith.andi %6, %3 : i1
    %8 = arith.addi %2, %1 : i32
    %9 = arith.select %7, %8, %2 : i32
    %c0_i32_3 = arith.constant 0 : i32
    %c0_i32_4 = arith.constant 0 : i32
    %c0_i32_5 = arith.constant 0 : i32
    return %9, %c0_i32_3, %c0_i32_4 : i32, i32, i32
  }
  func.func @transform_2(%arg0: i32, %arg1: memref<16xi32, #tpu.memory_space<smem>>) -> (i32, i32, i32) {
    %c0_i32 = arith.constant 0 : i32
    %c0_i32_0 = arith.constant 0 : i32
    %c0_i32_1 = arith.constant 0 : i32
    return %arg0, %c0_i32, %c0_i32_0 : i32, i32, i32
  }
}

</mosaic_0001>

<llo_original>
// kernel: tpu_custom_call.1
$region0: #{tpu_custom_call.1}
  #allocation0 [shape = 'u32[]', space=smem, size = 0x4, offset = 0x4, fixed_abs, tag = 'smem constant byte address 0x4 - core index']
  #allocation1 [shape = 'u32[144,128]{1,0:T(1,128)}', space=vmem, size = 0x12000, scoped, tag = 'internal scratch']
  #allocation2 [shape = 's32[1]{0}', space=sflag, size = 0x4, scoped, tag = 'scoped memory for tpu_custom_call.1']
  #allocation3 [shape = 'u8[512]{0}', space=smem, size = 0x200, scoped, tag = 'prefetched SMEM operand 0']
  %s0 = inlined_call_operand.hbm [shape: s32[16], index: 0, kind: input, shape index: {}]
  %s1 = inlined_call_operand.hbm [shape: f32[64,1,128], index: 1, kind: input, shape index: {}]
  %s2 = inlined_call_operand.hbm [shape: f32[8,1,128], index: 2, kind: input, shape index: {}]
  %s3 = inlined_call_operand.hbm [shape: f32[16,1,128], index: 3, kind: output, shape index: {}]
  %s4 = sld [smem:[#allocation0]]
  $region49: #{tpu_custom_call.1} parent=0
    _
  %s6 = ssub.s32 1, %s4
  %s7 = scalar_select 0, %s6, %s4
  %9 = dma.hbm_to_smem %s0, 16, [#allocation3], [#allocation2]
  %10 = dma.done [#allocation2], 16
  %11 = sfence
  $region1: #{tpu_custom_call.1} parent=0
    #allocation4 [shape = 'u8[1024]{0}', space=vmem, size = 0x400, scoped, tag = 'input window, operand 1']
    #allocation5 [shape = 's32[2]{0}', space=sflag, size = 0x8, scoped, tag = 'scoped memory for tpu_custom_call.1']
    #allocation6 [shape = 's32[2]{0}', space=sflag, size = 0x8, scoped, tag = 'scoped memory for tpu_custom_call.1']
    #allocation7 [shape = 'u8[1024]{0}', space=vmem, size = 0x400, scoped, tag = 'input window, operand 2']
    #allocation8 [shape = 's32[2]{0}', space=sflag, size = 0x8, scoped, tag = 'scoped memory for tpu_custom_call.1']
    #allocation9 [shape = 'u8[1024]{0}', space=vmem, size = 0x400, scoped, tag = 'output window, operand 0']
    %12 = vsyncpa [#allocation5], 0
    %s13 = scalar_lea.sflag [#allocation5], 1
    %14 = vsyncpa %s13, 0
    %15 = vsyncpa [#allocation8], 0
    %s16 = scalar_lea.sflag [#allocation8], 1
    %17 = vsyncpa %s16, 0
    %18 = vsyncpa [#allocation6], 0
    %s19 = scalar_lea.sflag [#allocation6], 1
    %20 = vsyncpa %s19, 0
    loop: start=0, step=1, limit=18
    $region2: #{tpu_custom_call.1} parent=1 // loop_pre_header
      _
    $region3: #{tpu_custom_call.1} parent=1 // loop_header
      %s22 = sphi 0, %s26
      %p23 = scmp.ge.s32.totalorder %s22, 18
      %s34 = sphi 0, %s36
      %s37 = sphi 0, %s34
      %s38 = sphi 0, %s37
      %s54 = sphi 0, %s38
      %s84 = sphi 0, %s86
      %s87 = sphi 0, %s84
      %s88 = sphi 0, %s87
      %s104 = sphi 0, %s88
      %s110 = sphi 0, %s112
      %s113 = sphi 0, %s110
      %s114 = sphi 0, %s113
      %s130 = sphi 0, %s114
    $region4: #{tpu_custom_call.1} parent=1 // loop_header_branch
      %25 = sbr.rel (%p23) target = $region8
    $region5: #{tpu_custom_call.1} parent=1 // loop_body
      %s27 = ssub.s32 %s22, 1
      %s28 = ssub.s32 %s22, 2
      %s29 = sadd.s32 %s22, 1
      %s30 = sld [smem:[#allocation3 + %s22]]
      %s31 = sld [smem:[#allocation3 + %s29]]
      %s32 = ssub.s32 %s30, %s31
      %p33 = scmp.eq.s32.totalorder %s32, 0
      %s35 = sadd.s32 %s34, 1
      %s36 = scalar_select %p33, %s34, %s35
      %p39 = pneg %p33
      %p40 = scmp.eq.s32.totalorder %s22, 15
      %p41 = por %p39, %p40
      %p42 = scmp.ne.s32.totalorder %s34, %s37
      %p43 = scmp.eq.s32.totalorder %s22, 0
      %p44 = por %p42, %p43
      %p45 = scmp.ne.s32.totalorder %s34, %s37
      %p46 = scmp.eq.s32.totalorder %s27, 15
      %p47 = por %p45, %p46
      %p48 = scmp.ne.s32.totalorder %s37, %s38
      %p49 = scmp.eq.s32.totalorder %s27, 0
      %p50 = por %p48, %p49
      %p51 = scmp.ne.s32.totalorder %s37, %s38
      %p52 = scmp.eq.s32.totalorder %s28, 15
      %p53 = por %p51, %p52
      %p55 = scmp.ne.s32.totalorder %s38, %s54
      %p56 = scmp.eq.s32.totalorder %s28, 0
      %p57 = por %p55, %p56
      %p58 = scmp.lt.s32.totalorder %s22, 0
      %s59 = ssub.s32 0, %s22
      %s60 = scalar_select %p58, %s59, %s22
      %s61 = sand.u32 %s60, 7
      %s62 = ssub.s32 0, %s61
      %s63 = scalar_select %p58, %s62, %s61
      %p64 = scmp.ne.s32.totalorder %s63, 0
      %p65 = scmp.lt.s32.totalorder %s63, 0
      %p66 = pnand %p65, %p64
      %p67 = pneg %p66
      %s68 = sadd.s32 %s63, 8
      %s69 = scalar_select %p67, %s68, %s63
      %p70 = scmp.lt.s32.totalorder %s29, 0
      %s71 = ssub.s32 0, %s29
      %s72 = scalar_select %p70, %s71, %s29
      %s73 = sand.u32 %s72, 7
      %s74 = ssub.s32 0, %s73
      %s75 = scalar_select %p70, %s74, %s73
      %p76 = scmp.ne.s32.totalorder %s75, 0
      %p77 = scmp.lt.s32.totalorder %s75, 0
      %p78 = pnand %p77, %p76
      %p79 = pneg %p78
      %s80 = sadd.s32 %s75, 8
      %s81 = scalar_select %p79, %s80, %s75
      %s82 = ssub.s32 %s69, %s81
      %p83 = scmp.eq.s32.totalorder %s82, 0
      %s85 = sadd.s32 %s84, 1
      %s86 = scalar_select %p83, %s84, %s85
      %p89 = pneg %p83
      %p90 = scmp.eq.s32.totalorder %s22, 15
      %p91 = por %p89, %p90
      %p92 = scmp.ne.s32.totalorder %s84, %s87
      %p93 = scmp.eq.s32.totalorder %s22, 0
      %p94 = por %p92, %p93
      %p95 = scmp.ne.s32.totalorder %s84, %s87
      %p96 = scmp.eq.s32.totalorder %s27, 15
      %p97 = por %p95, %p96
      %p98 = scmp.ne.s32.totalorder %s87, %s88
      %p99 = scmp.eq.s32.totalorder %s27, 0
      %p100 = por %p98, %p99
      %p101 = scmp.ne.s32.totalorder %s87, %s88
      %p102 = scmp.eq.s32.totalorder %s28, 15
      %p103 = por %p101, %p102
      %p105 = scmp.ne.s32.totalorder %s88, %s104
      %p106 = scmp.eq.s32.totalorder %s28, 0
      %p107 = por %p105, %p106
      %s108 = ssub.s32 %s22, %s29
      %p109 = scmp.eq.s32.totalorder %s108, 0
      %s111 = sadd.s32 %s110, 1
      %s112 = scalar_select %p109, %s110, %s111
      %p115 = pneg %p109
      %p116 = scmp.eq.s32.totalorder %s22, 15
      %p117 = por %p115, %p116
      %p118 = scmp.ne.s32.totalorder %s110, %s113
      %p119 = scmp.eq.s32.totalorder %s22, 0
      %p120 = por %p118, %p119
      %p121 = scmp.ne.s32.totalorder %s110, %s113
      %p122 = scmp.eq.s32.totalorder %s27, 15
      %p123 = por %p121, %p122
      %p124 = scmp.ne.s32.totalorder %s113, %s114
      %p125 = scmp.eq.s32.totalorder %s27, 0
      %p126 = por %p124, %p125
      %p127 = scmp.ne.s32.totalorder %s113, %s114
      %p128 = scmp.eq.s32.totalorder %s28, 15
      %p129 = por %p127, %p128
      %p131 = scmp.ne.s32.totalorder %s114, %s130
      %p132 = scmp.eq.s32.totalorder %s28, 0
      %p133 = por %p131, %p132
      %p134 = scmp.le.s32.totalorder 1, %s22
      %p135 = scmp.lt.s32.totalorder %s22, 17
      %p136 = pnand %p134, %p135
      %p137 = pneg %p136
      // Predicated region
      $region9: #{tpu_custom_call.1} parent=5 // pred_check
        _
      $region10: #{tpu_custom_call.1} parent=5 // pred_check_branch
        %139 = sbr.rel (%p136) target = $region12
      $region11: #{tpu_custom_call.1} parent=5 // pred_region
        %s140 = ssub.s32 %s22, 1
      $region12: #{tpu_custom_call.1} parent=5 // pred_fallthru
        _
      %p141 = scmp.lt.s32.totalorder %s22, 16
      // Predicated region
      $region13: #{tpu_custom_call.1} parent=5 // pred_check
        %p142 = pneg %p141
      $region14: #{tpu_custom_call.1} parent=5 // pred_check_branch
        %144 = sbr.rel (%p142) target = $region16
      $region15: #{tpu_custom_call.1} parent=5 // pred_region
        // Predicated region
        $region17: #{tpu_custom_call.1} parent=15 // pred_check
          %p145 = pneg %p44
        $region18: #{tpu_custom_call.1} parent=15 // pred_check_branch
          %147 = sbr.rel (%p145) target = $region20
        $region19: #{tpu_custom_call.1} parent=15 // pred_region
          %s148 = sand.u32 %s34, 1
          %s149 = scalar_lea.sflag [#allocation5], %s148
          %s150 = sand.u32 %s34, 1
          %s151 = scalar_lea.vmem [#allocation4], %s150
          %s152 = sld [smem:[#allocation3 + %s22]]
          %s154 = ssub.s32 16, 16
          %155 = vsyncadd %s149, %s154
          %s156 = smul.addr %s152, 16
          %s157 = scalar_lea.hbm %s1, %s156
          %s159 = sshll.u32 %s151, 4
          %s160 = int_to_ptr.vmem [resolvable:$true] %s159
          %162 = dma.hbm_to_vmem [thread:$0]  %s157, 16, %s160, %s149
        $region20: #{tpu_custom_call.1} parent=15 // pred_fallthru
          _
        // Predicated region
        $region21: #{tpu_custom_call.1} parent=15 // pred_check
          %p163 = pneg %p94
        $region22: #{tpu_custom_call.1} parent=15 // pred_check_branch
          %165 = sbr.rel (%p163) target = $region24
        $region23: #{tpu_custom_call.1} parent=15 // pred_region
          %s166 = sand.u32 %s84, 1
          %s167 = scalar_lea.sflag [#allocation8], %s166
          %s168 = sand.u32 %s84, 1
          %s169 = scalar_lea.vmem [#allocation7], %s168
          %p170 = scmp.lt.s32.totalorder %s22, 0
          %s171 = ssub.s32 0, %s22
          %s172 = scalar_select %p170, %s171, %s22
          %s173 = sand.u32 %s172, 7
          %s174 = ssub.s32 0, %s173
          %s175 = scalar_select %p170, %s174, %s173
          %p176 = scmp.ne.s32.totalorder %s175, 0
          %p177 = scmp.lt.s32.totalorder %s175, 0
          %p178 = pnand %p177, %p176
          %p179 = pneg %p178
          %s180 = sadd.s32 %s175, 8
          %s181 = scalar_select %p179, %s180, %s175
          %s183 = ssub.s32 16, 16
          %184 = vsyncadd %s167, %s183
          %s185 = smul.addr %s181, 16
          %s186 = scalar_lea.hbm %s2, %s185
          %s188 = sshll.u32 %s169, 4
          %s189 = int_to_ptr.vmem [resolvable:$true] %s188
          %191 = dma.hbm_to_vmem [thread:$0]  %s186, 16, %s189, %s167
        $region24: #{tpu_custom_call.1} parent=15 // pred_fallthru
          _
      $region16: #{tpu_custom_call.1} parent=5 // pred_fallthru
        _
      %p192 = scmp.le.s32.totalorder 1, %s22
      %p193 = scmp.lt.s32.totalorder %s22, 17
      %p194 = pnand %p192, %p193
      %p195 = pneg %p194
      // Predicated region
      $region25: #{tpu_custom_call.1} parent=5 // pred_check
        _
      $region26: #{tpu_custom_call.1} parent=5 // pred_check_branch
        %197 = sbr.rel (%p194) target = $region28
      $region27: #{tpu_custom_call.1} parent=5 // pred_region
        %s198 = ssub.s32 %s22, 1
        %s199 = sand.u32 %s37, 1
        %s200 = scalar_lea.sflag [#allocation5], %s199
        %s201 = sand.u32 %s37, 1
        %s202 = scalar_lea.vmem [#allocation4], %s201
        // Predicated region
        $region29: #{tpu_custom_call.1} parent=27 // pred_check
          %p203 = pneg %p50
        $region30: #{tpu_custom_call.1} parent=27 // pred_check_branch
          %205 = sbr.rel (%p203) target = $region32
        $region31: #{tpu_custom_call.1} parent=27 // pred_region
          %206 = dma.done %s200, 16
        $region32: #{tpu_custom_call.1} parent=27 // pred_fallthru
          _
        %s207 = sand.u32 %s87, 1
        %s208 = scalar_lea.sflag [#allocation8], %s207
        %s209 = sand.u32 %s87, 1
        %s210 = scalar_lea.vmem [#allocation7], %s209
        // Predicated region
        $region33: #{tpu_custom_call.1} parent=27 // pred_check
          %p211 = pneg %p100
        $region34: #{tpu_custom_call.1} parent=27 // pred_check_branch
          %213 = sbr.rel (%p211) target = $region36
        $region35: #{tpu_custom_call.1} parent=27 // pred_region
          %214 = dma.done %s208, 16
        $region36: #{tpu_custom_call.1} parent=27 // pred_fallthru
          _
        %s215 = sand.u32 %s37, 1
        %s216 = scalar_lea.sflag [#allocation5], %s215
        %s217 = sand.u32 %s37, 1
        %s218 = scalar_lea.vmem [#allocation4], %s217
        %p219 = pneg %p50
        %p220 = pneg %p47
        %s221 = sand.u32 %s87, 1
        %s222 = scalar_lea.sflag [#allocation8], %s221
        %s223 = sand.u32 %s87, 1
        %s224 = scalar_lea.vmem [#allocation7], %s223
        %p225 = pneg %p100
        %p226 = pneg %p97
        %p227 = pneg %p126
        %p228 = pneg %p123
        %s229 = sand.u32 %s113, 1
        %s230 = scalar_lea.sflag [#allocation6], %s229
        %s231 = sand.u32 %s113, 1
        %s232 = scalar_lea.vmem [#allocation9], %s231
        %s233 = sld [smem:[#allocation3 + %s27]]
        %p234 = scmp.lt.s32.totalorder %s27, 0
        %s235 = ssub.s32 0, %s27
        %s236 = scalar_select %p234, %s235, %s27
        %s237 = sand.u32 %s236, 7
        %s238 = ssub.s32 0, %s237
        %s239 = scalar_select %p234, %s238, %s237
        %p240 = scmp.ne.s32.totalorder %s239, 0
        %p241 = scmp.lt.s32.totalorder %s239, 0
        %p242 = pnand %p241, %p240
        %p243 = pneg %p242
        %s244 = sadd.s32 %s239, 8
        %s245 = scalar_select %p243, %s244, %s239
        %v246 = vld [vmem:[%s202] sm:$0x1]
        %v247 = vld [vmem:[%s210] sm:$0x1]
        %v248 = vadd.f32 %v246, %v247
        %249 = vst [vmem:[%s232] sm:$0x1] %v248
        %s250 = sand.u32 %s113, 1
        %s251 = scalar_lea.sflag [#allocation6], %s250
        %s252 = sand.u32 %s113, 1
        %s253 = scalar_lea.vmem [#allocation9], %s252
        // Predicated region
        $region37: #{tpu_custom_call.1} parent=27 // pred_check
          %p254 = pneg %p123
        $region38: #{tpu_custom_call.1} parent=27 // pred_check_branch
          %256 = sbr.rel (%p254) target = $region40
        $region39: #{tpu_custom_call.1} parent=27 // pred_region
          %s258 = ssub.s32 16, 16
          %259 = vsyncadd %s251, %s258
          %s260 = smul.addr %s27, 16
          %s261 = scalar_lea.hbm %s3, %s260
          %s263 = sshll.u32 %s253, 4
          %s264 = int_to_ptr.vmem [resolvable:$true] %s263
          %266 = dma.vmem_to_hbm [thread:$0]  %s264, 16, %s261, %s251
        $region40: #{tpu_custom_call.1} parent=27 // pred_fallthru
          _
      $region28: #{tpu_custom_call.1} parent=5 // pred_fallthru
        _
      %p267 = scmp.le.s32.totalorder 2, %s22
      // Predicated region
      $region41: #{tpu_custom_call.1} parent=5 // pred_check
        %p268 = pneg %p267
      $region42: #{tpu_custom_call.1} parent=5 // pred_check_branch
        %270 = sbr.rel (%p268) target = $region44
      $region43: #{tpu_custom_call.1} parent=5 // pred_region
        %s271 = ssub.s32 %s22, 2
        // Predicated region
        $region45: #{tpu_custom_call.1} parent=43 // pred_check
          %p272 = pneg %p129
        $region46: #{tpu_custom_call.1} parent=43 // pred_check_branch
          %274 = sbr.rel (%p272) target = $region48
        $region47: #{tpu_custom_call.1} parent=43 // pred_region
          %s275 = sand.u32 %s114, 1
          %s276 = scalar_lea.sflag [#allocation6], %s275
          %s277 = sand.u32 %s114, 1
          %s278 = scalar_lea.vmem [#allocation9], %s277
          %279 = dma.done %s276, 16
        $region48: #{tpu_custom_call.1} parent=43 // pred_fallthru
          _
      $region44: #{tpu_custom_call.1} parent=5 // pred_fallthru
        _
    $region6: #{tpu_custom_call.1} parent=1 // loop_footer
      %s26 = sadd.s32 1, %s22
    $region7: #{tpu_custom_call.1} parent=1 // loop_footer_branch
      %21 = sbr.rel target = $region3
    $region8: #{tpu_custom_call.1} parent=1 // loop_exit
      _
    %280 = vsyncpa [#allocation5], 1
    %s281 = scalar_lea.sflag [#allocation5], 1
    %282 = vsyncpa %s281, 1
    %283 = vsyncpa [#allocation8], 1
    %s284 = scalar_lea.sflag [#allocation8], 1
    %285 = vsyncpa %s284, 1
    %286 = vsyncpa [#allocation6], 1
    %s287 = scalar_lea.sflag [#allocation6], 1
    %288 = vsyncpa %s287, 1

</llo_original>
